<compile_context>
chip_gen: v5e
topology: v5e:2x2
jax: 0.10.0
libtpu: 0.0.40
codegen_flags: <defaults>
</compile_context>

<pallas_src>
import functools

import jax
import jax.numpy as jnp
from jax import lax
from jax.experimental import pallas as pl
from jax.experimental.pallas import tpu as pltpu

COMMITMENT_COST = 0.25
EMBEDDING_DIM = 256
NUM_EMBEDDINGS = 100


def _round_up(x, m):
    return ((x + m - 1) // m) * m


def _vq_kernel(x_ref, e_ref, bias_ref, q_ref, enc_ref, sse_ref, cnt_ref,
               *, n_valid, mask_rows, score_dtype):
    # x_ref:    (TN, D)   tile of flattened inputs (f32), streamed over the grid
    # e_ref:    (Kp, D)   padded codebook (f32), VMEM-resident (constant index_map)
    # bias_ref: (1, Kp)   -0.5*||e_k||^2 (f32); padded columns = -1e30 sentinel
    # q_ref:    (TN, D)   quantized tile (f32)
    # enc_ref:  (TN, Kp)  one-hot encodings tile (int8)
    # sse_ref:  (1,1,D)   per-tile partial sum of squared error (f32)
    # cnt_ref:  (1,1,Kp)  per-tile per-code counts (f32)
    x = x_ref[...]                                            # (TN, D) f32
    e = e_ref[...]                                            # (Kp, D) f32

    # score_k = x . e_k - 0.5*||e_k||^2  ; argmax(score) == argmin(distance)
    # (the ||x||^2 term of the torch distance is constant per row and dropped).
    dots = lax.dot_general(
        x.astype(score_dtype), e.astype(score_dtype),
        dimension_numbers=(((1,), (1,)), ((), ())),           # x @ e.T on the MXU
        preferred_element_type=jnp.float32)                   # (TN, Kp) f32 accum
    score = dots + bias_ref[...]                              # (TN, Kp) f32

    tn, kp = score.shape
    kiota = lax.broadcasted_iota(jnp.int32, score.shape, 1)
    best = jnp.max(score, axis=1, keepdims=True)
    # first-occurrence argmax == torch.argmin first-occurrence tie-breaking
    idx = jnp.min(jnp.where(score == best, kiota, kp), axis=1, keepdims=True)
    onehot = jnp.where(kiota == idx, 1.0, 0.0)                # (TN, Kp) f32

    if mask_rows:
        # zero out rows belonging to the padded tail of the last tile
        row = (pl.program_id(0) * tn
               + lax.broadcasted_iota(jnp.int32, (tn, 1), 0))
        valid = row < n_valid                                  # (TN, 1) bool
        onehot = jnp.where(valid, onehot, 0.0)

    # Exact f32 quantize: one-hot selects codebook rows bit-exactly.
    q = jnp.dot(onehot, e, preferred_element_type=jnp.float32)  # (TN, D)
    q_ref[...] = q
    enc_ref[...] = onehot.astype(jnp.int8)

    diff = q - x
    if mask_rows:
        diff = jnp.where(valid, diff, 0.0)

    # Per-tile partials (reduced in the JAX epilogue) -> grid axis is "parallel".
    sse_ref[...] = jnp.sum(diff * diff, axis=0, keepdims=True)[None]   # (1,1,D)
    cnt_ref[...] = jnp.sum(onehot, axis=0, keepdims=True)[None]        # (1,1,Kp)


def vector_quantizer(inputs, embedding_weight,
                     commitment_cost=COMMITMENT_COST,
                     tile_n=512, score_dtype=jnp.bfloat16):
    """Forward pass of the VectorQuantizer module.

    Returns (loss, quantized, perplexity, encodings). The straight-through
    `inputs + (quantized - inputs).detach()` equals `quantized` in value, so the
    forward outputs match the torch module.
    """
    K, D = embedding_weight.shape
    input_shape = inputs.shape
    flat = inputs.reshape(-1, D).astype(jnp.float32)
    N = flat.shape[0]

    # Row-tile size: multiple of 32 (int8 one-hot sublane packing), capped at
    # the padded row count. 512 rows => ~2.5 MB of double-buffered VMEM at
    # D=256/Kp=128, comfortably inside the 32 MiB scoped default on v5e/v6e and
    # the smaller 64 MiB VMEM of v7x.
    tile_n = max(32, min(int(tile_n), _round_up(N, 32)))
    tile_n = _round_up(tile_n, 32)
    grid = pl.cdiv(N, tile_n)
    n_pad = grid * tile_n
    if n_pad != N:
        flat = jnp.pad(flat, ((0, n_pad - N), (0, 0)))

    # Pad codebook rows up to a lane-friendly multiple of 128.
    Kp = _round_up(max(K, 128), 128)
    e_pad = jnp.zeros((Kp, D), jnp.float32).at[:K].set(
        embedding_weight.astype(jnp.float32))
    # bias = -0.5*||e||^2 in f32 (padded columns get -1e30 so they never win;
    # the sentinel never touches bf16, so no overflow).
    bias = -0.5 * jnp.sum(e_pad * e_pad, axis=1)
    bias = jnp.where(jnp.arange(Kp) < K, bias, -1e30).reshape(1, Kp)

    kernel = functools.partial(
        _vq_kernel, n_valid=N, mask_rows=(n_pad != N), score_dtype=score_dtype)

    out_shapes = (
        jax.ShapeDtypeStruct((n_pad, D), jnp.float32),    # quantized (flat, padded)
        jax.ShapeDtypeStruct((n_pad, Kp), jnp.int8),      # one-hot encodings (padded)
        jax.ShapeDtypeStruct((grid, 1, D), jnp.float32),  # per-tile SSE partials
        jax.ShapeDtypeStruct((grid, 1, Kp), jnp.float32), # per-tile count partials
    )

    q_flat, enc_pad, sse_part, cnt_part = pl.pallas_call(
        kernel,
        out_shape=out_shapes,
        grid_spec=pltpu.PrefetchScalarGridSpec(
            num_scalar_prefetch=0,
            grid=(grid,),
            in_specs=[
                pl.BlockSpec((tile_n, D), lambda i: (i, 0)),   # streamed x tiles
                pl.BlockSpec((Kp, D), lambda i: (0, 0)),       # resident codebook
                pl.BlockSpec((1, Kp), lambda i: (0, 0)),       # resident bias
            ],
            out_specs=[
                pl.BlockSpec((tile_n, D), lambda i: (i, 0)),
                pl.BlockSpec((tile_n, Kp), lambda i: (i, 0)),
                pl.BlockSpec((1, 1, D), lambda i: (i, 0, 0)),
                pl.BlockSpec((1, 1, Kp), lambda i: (i, 0, 0)),
            ],
        ),
        # Per-tile partials make every grid step independent -> "parallel"
        # (lets v7x shard the grid across its two TensorCores).
        compiler_params=pltpu.CompilerParams(
            dimension_semantics=("parallel",)),
    )(flat, e_pad, bias)

    # Scalar epilogue (tiny; plain JAX).
    sse = jnp.sum(sse_part)
    cnt = jnp.sum(cnt_part, axis=(0, 1))[:K]

    mse = sse / (N * D)                         # == F.mse_loss(quantized, inputs)
    loss = mse + commitment_cost * mse          # detach() only affects gradients
    quantized = q_flat[:N].reshape(input_shape)
    avg_probs = cnt / N
    perplexity = jnp.exp(-jnp.sum(avg_probs * jnp.log(avg_probs + 1e-10)))
    encodings = enc_pad[:N, :K].astype(jnp.float32)
    return loss, quantized, perplexity, encodings


def _reference(inputs, embedding_weight, commitment_cost=COMMITMENT_COST,
               score_dtype=jnp.float32):
    """Pure-JAX reference mirroring the torch forward (for validation).

    Index selection uses score = x.e - 0.5*||e||^2, algebraically identical to
    torch's argmin of ||x||^2 + ||e||^2 - 2*x.e (the ||x||^2 term is constant
    per row). `score_dtype` controls the matmul operand precision so the
    reference matches the kernel's precision choice.
    """
    K, D = embedding_weight.shape
    input_shape = inputs.shape
    flat = inputs.reshape(-1, D).astype(jnp.float32)
    w = embedding_weight.astype(jnp.float32)
    dots = jnp.dot(flat.astype(score_dtype), w.astype(score_dtype).T,
                   preferred_element_type=jnp.float32)
    score = dots - 0.5 * jnp.sum(w * w, axis=1)
    idx = jnp.argmax(score, axis=1)
    enc = jax.nn.one_hot(idx, K, dtype=jnp.float32)
    q = (enc @ w).reshape(input_shape)
    mse = jnp.mean((q - inputs) ** 2)
    loss = mse + commitment_cost * mse
    avg_probs = jnp.mean(enc, axis=0)
    perplexity = jnp.exp(-jnp.sum(avg_probs * jnp.log(avg_probs + 1e-10)))
    return loss, q, perplexity, enc


def _check(got, want):
    g_loss, g_q, g_ppl, g_enc = got
    r_loss, r_q, r_ppl, r_enc = want
    assert jnp.allclose(g_loss, r_loss, atol=1e-6, rtol=1e-5), (g_loss, r_loss)
    assert jnp.allclose(g_q, r_q, atol=1e-6, rtol=1e-5)
    assert jnp.allclose(g_ppl, r_ppl, atol=1e-4, rtol=1e-4), (g_ppl, r_ppl)
    assert jnp.allclose(g_enc, r_enc)


if __name__ == "__main__":
    key = jax.random.PRNGKey(0)
    k_emb, k_x1, k_x2 = jax.random.split(key, 3)

    # Deterministic init matching nn.Embedding.weight.uniform_(-1/K, 1/K)
    embedding_weight = jax.random.uniform(
        k_emb, (NUM_EMBEDDINGS, EMBEDDING_DIM), jnp.float32,
        minval=-1.0 / NUM_EMBEDDINGS, maxval=1.0 / NUM_EMBEDDINGS)

    # Case 1: small NHWC input (B, H, W, D=embedding_dim); default bf16 scores.
    x1 = jax.random.normal(k_x1, (2, 4, 4, EMBEDDING_DIM), jnp.float32) * 0.1
    out1 = jax.block_until_ready(vector_quantizer(x1, embedding_weight))
    _check(out1, _reference(x1, embedding_weight, score_dtype=jnp.bfloat16))

    # Case 2: N = 2*5*5 = 50 not a multiple of the tile -> exercises the
    # cdiv grid + padded-row masking path (grid=2); f32 scores for exact
    # torch-precision parity of index selection.
    x2 = jax.random.normal(k_x2, (2, 5, 5, EMBEDDING_DIM), jnp.float32) * 0.1
    out2 = jax.block_until_ready(
        vector_quantizer(x2, embedding_weight, tile_n=32,
                         score_dtype=jnp.float32))
    _check(out2, _reference(x2, embedding_weight, score_dtype=jnp.float32))

    print("KERNEL_OK")
</pallas_src>

<mosaic_0001>
module attributes {stable_mosaic.version = 11 : i64} {
  func.func @_vq_kernel(%arg0: i32, %arg1: memref<32x256xf32, #tpu.memory_space<vmem>>, %arg2: memref<128x256xf32, #tpu.memory_space<vmem>>, %arg3: memref<1x128xf32, #tpu.memory_space<vmem>>, %arg4: memref<32x256xf32, #tpu.memory_space<vmem>>, %arg5: memref<32x128xi8, #tpu.memory_space<vmem>>, %arg6: memref<1x1x256xf32, #tpu.memory_space<vmem>>, %arg7: memref<1x1x128xf32, #tpu.memory_space<vmem>>) attributes {dimension_semantics = [#tpu.dimension_semantics<parallel>], iteration_bounds = array<i64: 1>, scalar_prefetch = 0 : i64, scratch_operands = 0 : i64, tpu.core_type = #tpu.core_type<tc>, window_params = [{transform_indices = @transform_0, window_bounds = array<i64: 32, 256>}, {pipeline_mode = #tpu.pipeline_mode<synchronous>, transform_indices = @transform_1, window_bounds = array<i64: 128, 256>}, {pipeline_mode = #tpu.pipeline_mode<synchronous>, transform_indices = @transform_2, window_bounds = array<i64: 1, 128>}, {transform_indices = @transform_3, window_bounds = array<i64: 32, 256>}, {transform_indices = @transform_4, window_bounds = array<i64: 32, 128>}, {transform_indices = @transform_5, window_bounds = array<i64: 1, 1, 256>}, {transform_indices = @transform_6, window_bounds = array<i64: 1, 1, 128>}]} {
    %c0 = arith.constant 0 : index
    %c0_0 = arith.constant 0 : index
    %0 = vector.load %arg1[%c0, %c0_0] : memref<32x256xf32, #tpu.memory_space<vmem>>, vector<32x256xf32>
    %c0_1 = arith.constant 0 : index
    %c0_2 = arith.constant 0 : index
    %1 = vector.load %arg2[%c0_1, %c0_2] : memref<128x256xf32, #tpu.memory_space<vmem>>, vector<128x256xf32>
    %2 = arith.truncf %0 : vector<32x256xf32> to vector<32x256xbf16>
    %3 = arith.truncf %1 : vector<128x256xf32> to vector<128x256xbf16>
    %cst = arith.constant dense<0.000000e+00> : vector<32x128xf32>
    %4 = tpu.matmul %2, %3, %cst {dimension_numbers = #tpu.dot_dimension_numbers<[1], [1], [0], [0], [0, 0, 1, 0], [], []>} : vector<32x256xbf16>, vector<128x256xbf16>, vector<32x128xf32> -> vector<32x128xf32>
    %c0_3 = arith.constant 0 : index
    %c0_4 = arith.constant 0 : index
    %5 = vector.load %arg3[%c0_3, %c0_4] : memref<1x128xf32, #tpu.memory_space<vmem>>, vector<1x128xf32>
    %6 = vector.broadcast %5 : vector<1x128xf32> to vector<32x128xf32>
    %7 = arith.addf %4, %6 : vector<32x128xf32>
    %8 = tpu.iota {dimensions = array<i32: 1>} : vector<32x128xi32>
    %cst_5 = arith.constant dense<0xFF800000> : vector<32xf32>
    %9 = vector.multi_reduction <maximumf>, %7, %cst_5 [1] : vector<32x128xf32> to vector<32xf32>
    %10 = vector.shape_cast %9 : vector<32xf32> to vector<32x1xf32>
    %11 = vector.broadcast %10 : vector<32x1xf32> to vector<32x128xf32>
    %12 = arith.cmpf oeq, %7, %11 : vector<32x128xf32>
    %c128_i32 = arith.constant 128 : i32
    %13 = vector.broadcast %c128_i32 : i32 to vector<32x128xi32>
    %14 = arith.select %12, %8, %13 : vector<32x128xi1>, vector<32x128xi32>
    %cst_6 = arith.constant dense<2147483647> : vector<32xi32>
    %15 = vector.multi_reduction <minsi>, %14, %cst_6 [1] : vector<32x128xi32> to vector<32xi32>
    %16 = vector.shape_cast %15 : vector<32xi32> to vector<32x1xi32>
    %17 = vector.broadcast %16 : vector<32x1xi32> to vector<32x128xi32>
    %18 = arith.cmpi eq, %8, %17 : vector<32x128xi32>
    %cst_7 = arith.constant 1.000000e+00 : f32
    %cst_8 = arith.constant 0.000000e+00 : f32
    %19 = vector.broadcast %cst_7 : f32 to vector<32x128xf32>
    %20 = vector.broadcast %cst_8 : f32 to vector<32x128xf32>
    %21 = arith.select %18, %19, %20 : vector<32x128xi1>, vector<32x128xf32>
    %cst_9 = arith.constant dense<0.000000e+00> : vector<32x256xf32>
    %22 = tpu.matmul %21, %1, %cst_9 {dimension_numbers = #tpu.dot_dimension_numbers<[1], [0], [0], [1], [0, 0, 1, 1], [], []>} : vector<32x128xf32>, vector<128x256xf32>, vector<32x256xf32> -> vector<32x256xf32>
    %c0_10 = arith.constant 0 : index
    %c0_11 = arith.constant 0 : index
    %23 = vector.load %arg4[%c0_10, %c0_11] : memref<32x256xf32, #tpu.memory_space<vmem>>, vector<32x256xf32>
    tpu.vector_store %arg4[%c0_10, %c0_11], %22 {strides = array<i32>} : memref<32x256xf32, #tpu.memory_space<vmem>>, vector<32x256xf32>,
    %24 = arith.fptosi %21 : vector<32x128xf32> to vector<32x128xi8>
    %c0_12 = arith.constant 0 : index
    %c0_13 = arith.constant 0 : index
    %25 = vector.load %arg5[%c0_12, %c0_13] : memref<32x128xi8, #tpu.memory_space<vmem>>, vector<32x128xi8>
    tpu.vector_store %arg5[%c0_12, %c0_13], %24 {strides = array<i32>} : memref<32x128xi8, #tpu.memory_space<vmem>>, vector<32x128xi8>,
    %26 = arith.subf %22, %0 : vector<32x256xf32>
    %27 = arith.mulf %26, %26 : vector<32x256xf32>
    %cst_14 = arith.constant dense<0.000000e+00> : vector<256xf32>
    %28 = vector.multi_reduction <add>, %27, %cst_14 [0] : vector<32x256xf32> to vector<256xf32>
    %29 = vector.shape_cast %28 : vector<256xf32> to vector<1x256xf32>
    %30 = vector.shape_cast %29 : vector<1x256xf32> to vector<1x1x256xf32>
    %c0_15 = arith.constant 0 : index
    %c0_16 = arith.constant 0 : index
    %c0_17 = arith.constant 0 : index
    %31 = vector.load %arg6[%c0_15, %c0_16, %c0_17] : memref<1x1x256xf32, #tpu.memory_space<vmem>>, vector<1x1x256xf32>
    tpu.vector_store %arg6[%c0_15, %c0_16, %c0_17], %30 {strides = array<i32>} : memref<1x1x256xf32, #tpu.memory_space<vmem>>, vector<1x1x256xf32>,
    %cst_18 = arith.constant dense<0.000000e+00> : vector<128xf32>
    %32 = vector.multi_reduction <add>, %21, %cst_18 [0] : vector<32x128xf32> to vector<128xf32>
    %33 = vector.shape_cast %32 : vector<128xf32> to vector<1x128xf32>
    %34 = vector.shape_cast %33 : vector<1x128xf32> to vector<1x1x128xf32>
    %c0_19 = arith.constant 0 : index
    %c0_20 = arith.constant 0 : index
    %c0_21 = arith.constant 0 : index
    %35 = vector.load %arg7[%c0_19, %c0_20, %c0_21] : memref<1x1x128xf32, #tpu.memory_space<vmem>>, vector<1x1x128xf32>
    tpu.vector_store %arg7[%c0_19, %c0_20, %c0_21], %34 {strides = array<i32>} : memref<1x1x128xf32, #tpu.memory_space<vmem>>, vector<1x1x128xf32>,
    return
  }
  func.func @transform_0(%arg0: i32) -> (i32, i32) {
    %c0_i32 = arith.constant 0 : i32
    %c0_i32_0 = arith.constant 0 : i32
    return %arg0, %c0_i32 : i32, i32
  }
  func.func @transform_1(%arg0: i32) -> (i32, i32) {
    %c0_i32 = arith.constant 0 : i32
    %c0_i32_0 = arith.constant 0 : i32
    %c0_i32_1 = arith.constant 0 : i32
    return %c0_i32, %c0_i32_0 : i32, i32
  }
  func.func @transform_2(%arg0: i32) -> (i32, i32) {
    %c0_i32 = arith.constant 0 : i32
    %c0_i32_0 = arith.constant 0 : i32
    %c0_i32_1 = arith.constant 0 : i32
    return %c0_i32, %c0_i32_0 : i32, i32
  }
  func.func @transform_3(%arg0: i32) -> (i32, i32) {
    %c0_i32 = arith.constant 0 : i32
    %c0_i32_0 = arith.constant 0 : i32
    return %arg0, %c0_i32 : i32, i32
  }
  func.func @transform_4(%arg0: i32) -> (i32, i32) {
    %c0_i32 = arith.constant 0 : i32
    %c0_i32_0 = arith.constant 0 : i32
    return %arg0, %c0_i32 : i32, i32
  }
  func.func @transform_5(%arg0: i32) -> (i32, i32, i32) {
    %c0_i32 = arith.constant 0 : i32
    %c0_i32_0 = arith.constant 0 : i32
    %c0_i32_1 = arith.constant 0 : i32
    return %arg0, %c0_i32, %c0_i32_0 : i32, i32, i32
  }
  func.func @transform_6(%arg0: i32) -> (i32, i32, i32) {
    %c0_i32 = arith.constant 0 : i32
    %c0_i32_0 = arith.constant 0 : i32
    %c0_i32_1 = arith.constant 0 : i32
    return %arg0, %c0_i32, %c0_i32_0 : i32, i32, i32
  }
}

</mosaic_0001>

<llo_original>
// kernel: tpu_custom_call.1
$region0: #{tpu_custom_call.1}
  #allocation0 [shape = 'u32[]', space=smem, size = 0x4, offset = 0x4, fixed_abs, tag = 'smem constant byte address 0x4 - core index']
  #allocation1 [shape = 'u32[72,128]{1,0:T(1,128)}', space=vmem, size = 0x9000, scoped, tag = 'internal scratch']
  %s0 = inlined_call_operand.hbm [shape: f32[32,256], index: 0, kind: input, shape index: {}]
  %s1 = inlined_call_operand.hbm [shape: f32[128,256], index: 1, kind: input, shape index: {}]
  %s2 = inlined_call_operand.vmem [shape: f32[1,128], index: 2, kind: input, shape index: {}]
  %s3 = inlined_call_operand.hbm [shape: f32[32,256], index: 3, kind: output, shape index: {0}]
  %s4 = inlined_call_operand.hbm [shape: s8[32,128], index: 4, kind: output, shape index: {1}]
  %s5 = inlined_call_operand.hbm [shape: f32[1,1,256], index: 5, kind: output, shape index: {2}]
  %s6 = inlined_call_operand.hbm [shape: f32[1,1,128], index: 6, kind: output, shape index: {3}]
  %7 = xla_tuple %s3, %s4, %s5, %s6
  %s8 = sld [smem:[#allocation0]]
  $region54: #{tpu_custom_call.1} parent=0
    _
  %s10 = ssub.s32 1, %s8
  %s11 = scalar_select 0, %s10, %s8
  $region1: #{tpu_custom_call.1} parent=0
    #allocation2 [shape = 'u8[32768]{0}', space=vmem, size = 0x8000, scoped, tag = 'input window, operand 0, single buffered']
    #allocation3 [shape = 's32[1]{0}', space=sflag, size = 0x4, scoped, tag = 'scoped memory for tpu_custom_call.1']
    #allocation4 [shape = 's32[1]{0}', space=sflag, size = 0x4, scoped, tag = 'scoped memory for tpu_custom_call.1']
    #allocation5 [shape = 'u8[131072]{0}', space=vmem, size = 0x20000, scoped, tag = 'input window, operand 1, single buffered']
    #allocation6 [shape = 's32[1]{0}', space=sflag, size = 0x4, scoped, tag = 'scoped memory for tpu_custom_call.1']
    #allocation7 [shape = 'u8[32768]{0}', space=vmem, size = 0x8000, scoped, tag = 'output window, operand 0, single buffered']
    #allocation8 [shape = 'u8[4096]{0}', space=vmem, size = 0x1000, scoped, tag = 'output window, operand 1, single buffered']
    #allocation9 [shape = 's32[1]{0}', space=sflag, size = 0x4, scoped, tag = 'scoped memory for tpu_custom_call.1']
    #allocation10 [shape = 'u8[1024]{0}', space=vmem, size = 0x400, scoped, tag = 'output window, operand 2, single buffered']
    #allocation11 [shape = 'u8[512]{0}', space=vmem, size = 0x400, scoped, tag = 'output window, operand 3, single buffered']
    #allocation12 [shape = 's32[1]{0}', space=sflag, size = 0x4, scoped, tag = 'scoped memory for tpu_custom_call.1']
    %12 = vsyncpa [#allocation3], 0
    %13 = vsyncpa [#allocation6], 0
    %14 = vsyncpa [#allocation4], 0
    %15 = vsyncpa [#allocation9], 0
    %16 = vsyncpa [#allocation12], 0
    // Predicated region
    $region2: #{tpu_custom_call.1} parent=1 // pred_check
      _
    $region3: #{tpu_custom_call.1} parent=1 // pred_check_branch
      %18 = sbr.rel (0) target = $region5
    $region4: #{tpu_custom_call.1} parent=1 // pred_region
      %20 = vsyncadd [#allocation3], 0
      %s21 = sshll.u32 %s0, 4
      %s22 = int_to_ptr.hbm [resolvable:$true] %s21
      %s23 = sshll.u32 [#allocation2], 4
      %s24 = int_to_ptr.vmem [resolvable:$true] %s23
      %29 = dma.hbm_to_vmem [thread:$0]  %s22, 1024, %s24, [#allocation3], 256, 256, 16
    $region5: #{tpu_custom_call.1} parent=1 // pred_fallthru
      _
    // Predicated region
    $region6: #{tpu_custom_call.1} parent=1 // pred_check
      _
    $region7: #{tpu_custom_call.1} parent=1 // pred_check_branch
      %31 = sbr.rel (0) target = $region9
    $region8: #{tpu_custom_call.1} parent=1 // pred_region
      %33 = vsyncadd [#allocation6], 0
      %s34 = sshll.u32 %s1, 4
      %s35 = int_to_ptr.hbm [resolvable:$true] %s34
      %s36 = sshll.u32 [#allocation5], 4
      %s37 = int_to_ptr.vmem [resolvable:$true] %s36
      %42 = dma.hbm_to_vmem [thread:$0]  %s35, 4096, %s37, [#allocation6], 256, 256, 16
    $region9: #{tpu_custom_call.1} parent=1 // pred_fallthru
      _
    // Predicated region
    $region10: #{tpu_custom_call.1} parent=1 // pred_check
      _
    $region11: #{tpu_custom_call.1} parent=1 // pred_check_branch
      %44 = sbr.rel (0) target = $region13
    $region12: #{tpu_custom_call.1} parent=1 // pred_region
      _
    $region13: #{tpu_custom_call.1} parent=1 // pred_fallthru
      _
    // Predicated region
    $region14: #{tpu_custom_call.1} parent=1 // pred_check
      _
    $region15: #{tpu_custom_call.1} parent=1 // pred_check_branch
      %46 = sbr.rel (0) target = $region17
    $region16: #{tpu_custom_call.1} parent=1 // pred_region
      %48 = dma.done [#allocation3], 1024
    $region17: #{tpu_custom_call.1} parent=1 // pred_fallthru
      _
    // Predicated region
    $region18: #{tpu_custom_call.1} parent=1 // pred_check
      _
    $region19: #{tpu_custom_call.1} parent=1 // pred_check_branch
      %50 = sbr.rel (0) target = $region21
    $region20: #{tpu_custom_call.1} parent=1 // pred_region
      %52 = dma.done [#allocation6], 4096
    $region21: #{tpu_custom_call.1} parent=1 // pred_fallthru
      _
    %v53 = vld [vmem:[#allocation2] sm:$0xff]
    %v54 = vld [vmem:[#allocation2 + $0x8] sm:$0xff]
    %v55 = vld [vmem:[#allocation2 + $0x10] sm:$0xff]
    %v56 = vld [vmem:[#allocation2 + $0x18] sm:$0xff]
    %v57 = vld [vmem:[#allocation2 + $0x20] sm:$0xff]
    %v58 = vld [vmem:[#allocation2 + $0x28] sm:$0xff]
    %v59 = vld [vmem:[#allocation2 + $0x30] sm:$0xff]
    %v60 = vld [vmem:[#allocation2 + $0x38] sm:$0xff]
    %v61 = vld [vmem:[#allocation5] sm:$0xff]
    %v62 = vld [vmem:[#allocation5 + $0x8] sm:$0xff]
    %v63 = vld [vmem:[#allocation5 + $0x10] sm:$0xff]
    %v64 = vld [vmem:[#allocation5 + $0x18] sm:$0xff]
    %v65 = vld [vmem:[#allocation5 + $0x20] sm:$0xff]
    %v66 = vld [vmem:[#allocation5 + $0x28] sm:$0xff]
    %v67 = vld [vmem:[#allocation5 + $0x30] sm:$0xff]
    %v68 = vld [vmem:[#allocation5 + $0x38] sm:$0xff]
    %v69 = vld [vmem:[#allocation5 + $0x40] sm:$0xff]
    %v70 = vld [vmem:[#allocation5 + $0x48] sm:$0xff]
    %v71 = vld [vmem:[#allocation5 + $0x50] sm:$0xff]
    %v72 = vld [vmem:[#allocation5 + $0x58] sm:$0xff]
    %v73 = vld [vmem:[#allocation5 + $0x60] sm:$0xff]
    %v74 = vld [vmem:[#allocation5 + $0x68] sm:$0xff]
    %v75 = vld [vmem:[#allocation5 + $0x70] sm:$0xff]
    %v76 = vld [vmem:[#allocation5 + $0x78] sm:$0xff]
    %v77 = vld [vmem:[#allocation5 + $0x80] sm:$0xff]
    %v78 = vld [vmem:[#allocation5 + $0x88] sm:$0xff]
    %v79 = vld [vmem:[#allocation5 + $0x90] sm:$0xff]
    %v80 = vld [vmem:[#allocation5 + $0x98] sm:$0xff]
    %v81 = vld [vmem:[#allocation5 + $0xa0] sm:$0xff]
    %v82 = vld [vmem:[#allocation5 + $0xa8] sm:$0xff]
    %v83 = vld [vmem:[#allocation5 + $0xb0] sm:$0xff]
    %v84 = vld [vmem:[#allocation5 + $0xb8] sm:$0xff]
    %v85 = vld [vmem:[#allocation5 + $0xc0] sm:$0xff]
    %v86 = vld [vmem:[#allocation5 + $0xc8] sm:$0xff]
    %v87 = vld [vmem:[#allocation5 + $0xd0] sm:$0xff]
    %v88 = vld [vmem:[#allocation5 + $0xd8] sm:$0xff]
    %v89 = vld [vmem:[#allocation5 + $0xe0] sm:$0xff]
    %v90 = vld [vmem:[#allocation5 + $0xe8] sm:$0xff]
    %v91 = vld [vmem:[#allocation5 + $0xf0] sm:$0xff]
    %v92 = vld [vmem:[#allocation5 + $0xf8] sm:$0xff]
    %v93 = vpack.c.bf16 %v55, %v53
    %v94 = vpack.c.bf16 %v56, %v54
    %v95 = vpack.c.bf16 %v59, %v57
    %v96 = vpack.c.bf16 %v60, %v58
    %v97 = vpack.c.bf16 %v63, %v61
    %v98 = vpack.c.bf16 %v64, %v62
    %v99 = vpack.c.bf16 %v67, %v65
    %v100 = vpack.c.bf16 %v68, %v66
    %v101 = vpack.c.bf16 %v71, %v69
    %v102 = vpack.c.bf16 %v72, %v70
    %v103 = vpack.c.bf16 %v75, %v73
    %v104 = vpack.c.bf16 %v76, %v74
    %v105 = vpack.c.bf16 %v79, %v77
    %v106 = vpack.c.bf16 %v80, %v78
    %v107 = vpack.c.bf16 %v83, %v81
    %v108 = vpack.c.bf16 %v84, %v82
    %v109 = vpack.c.bf16 %v87, %v85
    %v110 = vpack.c.bf16 %v88, %v86
    %v111 = vpack.c.bf16 %v91, %v89
    %v112 = vpack.c.bf16 %v92, %v90
    %v113 = vld [vmem:[%s2] sm:$0x1]
    %v115 = vperm.slane %v113, 0
    %117 = vmatpush.bf16.xpose.msra.mxu0 %v111
    %118 = vmatpush.bf16.xpose.msra.mxu0 %v109
    %119 = vmatpush.bf16.xpose.msra.mxu0 %v107
    %120 = vmatpush.bf16.xpose.msra.mxu0 %v105
    %121 = vmatpush.bf16.xpose.msra.mxu0 %v103
    %122 = vmatpush.bf16.xpose.msra.mxu0 %v101
    %123 = vmatpush.bf16.xpose.msra.mxu0 %v99
    %124 = vmatpush.bf16.xpose.msra.mxu0 %v97
    %125 = vmatmul.bf16.gmra.mxu0 %v93
    %v126 = vpop.f32.mrf.mxu0
    %v127 = vadd.f32 %v115, %v126
    %v128 = vpop.f32.mrf.mxu0
    %v129 = vadd.f32 %v115, %v128
    %130 = vmatmul.bf16.gmra.mxu0 %v95
    %v131 = vpop.f32.mrf.mxu0
    %v132 = vadd.f32 %v115, %v131
    %v133 = vpop.f32.mrf.mxu0
    %v134 = vadd.f32 %v115, %v133
    %135 = vdwg.mxu0
    %136 = vmatpush.bf16.xpose.msra.mxu0 %v112
    %137 = vmatpush.bf16.xpose.msra.mxu0 %v110
    %138 = vmatpush.bf16.xpose.msra.mxu0 %v108
    %139 = vmatpush.bf16.xpose.msra.mxu0 %v106
    %140 = vmatpush.bf16.xpose.msra.mxu0 %v104
    %141 = vmatpush.bf16.xpose.msra.mxu0 %v102
    %142 = vmatpush.bf16.xpose.msra.mxu0 %v100
    %143 = vmatpush.bf16.xpose.msra.mxu0 %v98
    %144 = vmatmul.bf16.gmra.mxu0 %v94
    %v145 = vpop.f32.mrf.mxu0
    %v146 = vadd.f32 %v127, %v145
    %v147 = vpop.f32.mrf.mxu0
    %v148 = vadd.f32 %v129, %v147
    %149 = vmatmul.bf16.gmra.mxu0 %v96
    %v150 = vpop.f32.mrf.mxu0
    %v151 = vadd.f32 %v132, %v150
    %v152 = vpop.f32.mrf.mxu0
    %v153 = vadd.f32 %v134, %v152
    %154 = vdwg.mxu0
    %v155 = vlaneseq
    %v156 = vand.u32 %v155, 127
    %157 = vmax.xlane.f32.xlu0 %v146
    %v158 = vpop.xlane.xlu0 %157
    %159 = vmax.xlane.f32.xlu0 %v148
    %v160 = vpop.xlane.xlu0 %159
    %161 = vmax.xlane.f32.xlu0 %v151
    %v162 = vpop.xlane.xlu0 %161
    %163 = vmax.xlane.f32.xlu0 %v153
    %v164 = vpop.xlane.xlu0 %163
    %vm165 = vcmp.eq.f32.partialorder %v146, %v158
    %vm166 = vcmp.eq.f32.partialorder %v148, %v160
    %vm167 = vcmp.eq.f32.partialorder %v151, %v162
    %vm168 = vcmp.eq.f32.partialorder %v153, %v164
    %v169 = vsel %vm165, %v156, 128
    %v170 = vsel %vm166, %v156, 128
    %v171 = vsel %vm167, %v156, 128
    %v172 = vsel %vm168, %v156, 128
    %v173 = vand.u32 %v169, 65535
    %v174 = vshra.s32 %v169, 16
    %v175 = vcvt.s32.f32 %v173
    %v176 = vcvt.s32.f32 %v174
    %177 = vmin.xlane.f32.xlu0 %v176
    %v178 = vpop.xlane.xlu0 %177
    %vm179 = vcmp.eq.f32.partialorder %v176, %v178
    %v180 = vsel %vm179, %v175, inf
    %181 = vmin.xlane.f32.xlu0 %v180
    %v182 = vpop.xlane.xlu0 %181
    %v183 = vcvt.f32.s32 %v182
    %v184 = vcvt.f32.s32 %v178
    %v185 = vshll.u32 %v184, 16
    %v186 = vadd.s32 %v185, %v183
    %v187 = vand.u32 %v170, 65535
    %v188 = vshra.s32 %v170, 16
    %v189 = vcvt.s32.f32 %v187
    %v190 = vcvt.s32.f32 %v188
    %191 = vmin.xlane.f32.xlu0 %v190
    %v192 = vpop.xlane.xlu0 %191
    %vm193 = vcmp.eq.f32.partialorder %v190, %v192
    %v194 = vsel %vm193, %v189, inf
    %195 = vmin.xlane.f32.xlu0 %v194
    %v196 = vpop.xlane.xlu0 %195
    %v197 = vcvt.f32.s32 %v196
    %v198 = vcvt.f32.s32 %v192
    %v199 = vshll.u32 %v198, 16
    %v200 = vadd.s32 %v199, %v197
    %v201 = vand.u32 %v171, 65535
    %v202 = vshra.s32 %v171, 16
    %v203 = vcvt.s32.f32 %v201
    %v204 = vcvt.s32.f32 %v202
    %205 = vmin.xlane.f32.xlu0 %v204
    %v206 = vpop.xlane.xlu0 %205
    %vm207 = vcmp.eq.f32.partialorder %v204, %v206
    %v208 = vsel %vm207, %v203, inf
    %209 = vmin.xlane.f32.xlu0 %v208
    %v210 = vpop.xlane.xlu0 %209
    %v211 = vcvt.f32.s32 %v210
    %v212 = vcvt.f32.s32 %v206
    %v213 = vshll.u32 %v212, 16
    %v214 = vadd.s32 %v213, %v211
    %v215 = vand.u32 %v172, 65535
    %v216 = vshra.s32 %v172, 16
    %v217 = vcvt.s32.f32 %v215
    %v218 = vcvt.s32.f32 %v216
    %219 = vmin.xlane.f32.xlu0 %v218
    %v220 = vpop.xlane.xlu0 %219
    %vm221 = vcmp.eq.f32.partialorder %v218, %v220
    %v222 = vsel %vm221, %v217, inf
    %223 = vmin.xlane.f32.xlu0 %v222
    %v224 = vpop.xlane.xlu0 %223
    %v225 = vcvt.f32.s32 %v224
    %v226 = vcvt.f32.s32 %v220
    %v227 = vshll.u32 %v226, 16
    %v228 = vadd.s32 %v227, %v225
    %vm229 = vcmp.eq.s32.totalorder %v156, %v186
    %vm230 = vcmp.eq.s32.totalorder %v156, %v200
    %vm231 = vcmp.eq.s32.totalorder %v156, %v214
    %vm232 = vcmp.eq.s32.totalorder %v156, %v228
    %v233 = vsel %vm229, 1.0, 0.0
    %v234 = vsel %vm230, 1.0, 0.0
    %v235 = vsel %vm231, 1.0, 0.0
    %v236 = vsel %vm232, 1.0, 0.0
    %237 = vmatpush.msra.mxu0 %v91
    %238 = vmatpush.msra.mxu0 %v89
    %239 = vmatpush.msra.mxu0 %v87
    %240 = vmatpush.msra.mxu0 %v85
    %241 = vmatpush.msra.mxu0 %v83
    %242 = vmatpush.msra.mxu0 %v81
    %243 = vmatpush.msra.mxu0 %v79
    %244 = vmatpush.msra.mxu0 %v77
    %245 = vmatpush.msra.mxu0 %v75
    %246 = vmatpush.msra.mxu0 %v73
    %247 = vmatpush.msra.mxu0 %v71
    %248 = vmatpush.msra.mxu0 %v69
    %249 = vmatpush.msra.mxu0 %v67
    %250 = vmatpush.msra.mxu0 %v65
    %251 = vmatpush.msra.mxu0 %v63
    %252 = vmatpush.msra.mxu0 %v61
    %253 = vmatmul.f32.gmra.mxu0 %v233
    %v254 = vpop.f32.mrf.mxu0
    %v255 = vadd.f32 0.0, %v254
    %256 = vmatmul.f32.gmra.mxu0 %v234
    %v257 = vpop.f32.mrf.mxu0
    %v258 = vadd.f32 0.0, %v257
    %259 = vmatmul.f32.gmra.mxu0 %v235
    %v260 = vpop.f32.mrf.mxu0
    %v261 = vadd.f32 0.0, %v260
    %262 = vmatmul.f32.gmra.mxu0 %v236
    %v263 = vpop.f32.mrf.mxu0
    %v264 = vadd.f32 0.0, %v263
    %265 = vdwg.mxu0
    %266 = vmatpush.msra.mxu0 %v92
    %267 = vmatpush.msra.mxu0 %v90
    %268 = vmatpush.msra.mxu0 %v88
    %269 = vmatpush.msra.mxu0 %v86
    %270 = vmatpush.msra.mxu0 %v84
    %271 = vmatpush.msra.mxu0 %v82
    %272 = vmatpush.msra.mxu0 %v80
    %273 = vmatpush.msra.mxu0 %v78
    %274 = vmatpush.msra.mxu0 %v76
    %275 = vmatpush.msra.mxu0 %v74
    %276 = vmatpush.msra.mxu0 %v72
    %277 = vmatpush.msra.mxu0 %v70
    %278 = vmatpush.msra.mxu0 %v68
    %279 = vmatpush.msra.mxu0 %v66
    %280 = vmatpush.msra.mxu0 %v64
    %281 = vmatpush.msra.mxu0 %v62
    %282 = vmatmul.f32.gmra.mxu0 %v233
    %v283 = vpop.f32.mrf.mxu0
    %v284 = vadd.f32 0.0, %v283
    %285 = vmatmul.f32.gmra.mxu0 %v234
    %v286 = vpop.f32.mrf.mxu0
    %v287 = vadd.f32 0.0, %v286
    %288 = vmatmul.f32.gmra.mxu0 %v235
    %v289 = vpop.f32.mrf.mxu0
    %v290 = vadd.f32 0.0, %v289
    %291 = vmatmul.f32.gmra.mxu0 %v236
    %v292 = vpop.f32.mrf.mxu0
    %v293 = vadd.f32 0.0, %v292
    %294 = vdwg.mxu0
    %295 = vst [vmem:[#allocation7] sm:$0xff] %v255
    %296 = vst [vmem:[#allocation7 + $0x8] sm:$0xff] %v284
    %297 = vst [vmem:[#allocation7 + $0x10] sm:$0xff] %v258
    %298 = vst [vmem:[#allocation7 + $0x18] sm:$0xff] %v287
    %299 = vst [vmem:[#allocation7 + $0x20] sm:$0xff] %v261
    %300 = vst [vmem:[#allocation7 + $0x28] sm:$0xff] %v290
    %301 = vst [vmem:[#allocation7 + $0x30] sm:$0xff] %v264
    %302 = vst [vmem:[#allocation7 + $0x38] sm:$0xff] %v293
    %v303 = vmax.f32 %v233, -128.0
    %v304 = vmax.f32 %v234, -128.0
    %v305 = vmax.f32 %v235, -128.0
    %v306 = vmax.f32 %v236, -128.0
    %v307 = vmin.f32 %v303, 127.0
    %v308 = vmin.f32 %v304, 127.0
    %v309 = vmin.f32 %v305, 127.0
    %v310 = vmin.f32 %v306, 127.0
    %v311 = vcvt.f32.s32.to.zero.pseudo %v307
    %v312 = vcvt.f32.s32.to.zero.pseudo %v308
    %v313 = vcvt.f32.s32.to.zero.pseudo %v309
    %v314 = vcvt.f32.s32.to.zero.pseudo %v310
    %v315 = vpack.c.b16 %v312, %v311
    %v316 = vpack.c.b16 %v314, %v313
    %v317 = vpack.c.b8 %v316, %v315
    %318 = vst [vmem:[#allocation8] sm:$0xff] %v317
    %v319 = vsub.f32 %v255, %v53
    %v320 = vsub.f32 %v284, %v54
    %v321 = vsub.f32 %v258, %v55
    %v322 = vsub.f32 %v287, %v56
    %v323 = vsub.f32 %v261, %v57
    %v324 = vsub.f32 %v290, %v58
    %v325 = vsub.f32 %v264, %v59
    %v326 = vsub.f32 %v293, %v60
    %v327 = vmul.f32 %v319, %v319
    %v328 = vmul.f32 %v320, %v320
    %v329 = vmul.f32 %v321, %v321
    %v330 = vmul.f32 %v322, %v322
    %v331 = vmul.f32 %v323, %v323
    %v332 = vmul.f32 %v324, %v324
    %v333 = vmul.f32 %v325, %v325
    %v334 = vmul.f32 %v326, %v326
    %v335 = vadd.f32 %v327, %v329
    %v336 = vadd.f32 %v335, %v331
    %v337 = vadd.f32 %v336, %v333
    %v338 = vrot.slane %v337, 4
    %v339 = vadd.f32 %v337, %v338
    %v340 = vrot.slane %v339, 2
    %v341 = vadd.f32 %v339, %v340
    %v342 = vrot.slane %v341, 1
    %v343 = vadd.f32 %v341, %v342
    %v344 = vadd.f32 %v328, %v330
    %v345 = vadd.f32 %v344, %v332
    %v346 = vadd.f32 %v345, %v334
    %v347 = vrot.slane %v346, 4
    %v348 = vadd.f32 %v346, %v347
    %v349 = vrot.slane %v348, 2
    %v350 = vadd.f32 %v348, %v349
    %v351 = vrot.slane %v350, 1
    %v352 = vadd.f32 %v350, %v351
    %v355 = vrot.slane %v352, 7
    %vm356 = vcmask 1040384
    %v357 = vsel %vm356, %v343, %v355
    %v359 = vlaneseq
    %vm360 = vcmp.ge.s32.totalorder %v359, 0
    %vm361 = vcmp.lt.s32.totalorder %v359, 256
    %vm362 = vmand %vm360, %vm361
    %363 = vst.msk [vmem:[#allocation10] sm:$0x3] %vm362, %v357
    %v364 = vadd.f32 %v233, %v234
    %v365 = vadd.f32 %v364, %v235
    %v366 = vadd.f32 %v365, %v236
    %v367 = vrot.slane %v366, 4
    %v368 = vadd.f32 %v366, %v367
    %v369 = vrot.slane %v368, 2
    %v370 = vadd.f32 %v368, %v369
    %v371 = vrot.slane %v370, 1
    %v372 = vadd.f32 %v370, %v371
    %373 = vst [vmem:[#allocation11] sm:$0x1] %v372
    // Predicated region
    $region22: #{tpu_custom_call.1} parent=1 // pred_check
      _
    $region23: #{tpu_custom_call.1} parent=1 // pred_check_branch
      %375 = sbr.rel (0) target = $region25
    $region24: #{tpu_custom_call.1} parent=1 // pred_region
      %377 = vsyncadd [#allocation4], 0
      %s378 = sshll.u32 [#allocation7], 4
      %s379 = int_to_ptr.vmem [resolvable:$true] %s378
      %s380 = sshll.u32 %s3, 4
      %s381 = int_to_ptr.hbm [resolvable:$true] %s380
      %386 = dma.vmem_to_hbm [thread:$0]  %s379, 1024, %s381, [#allocation4], 256, 256, 16
    $region25: #{tpu_custom_call.1} parent=1 // pred_fallthru
      _
    // Predicated region
    $region26: #{tpu_custom_call.1} parent=1 // pred_check
      _
    $region27: #{tpu_custom_call.1} parent=1 // pred_check_branch
      %388 = sbr.rel (0) target = $region29
    $region28: #{tpu_custom_call.1} parent=1 // pred_region
      %390 = vsyncadd [#allocation9], 0
      %s392 = sshll.u32 [#allocation8], 4
      %s393 = int_to_ptr.vmem [resolvable:$true] %s392
      %s394 = sshll.u32 %s4, 4
      %s395 = int_to_ptr.hbm [resolvable:$true] %s394
      %397 = dma.vmem_to_hbm [thread:$0]  %s393, 128, %s395, [#allocation9]
    $region29: #{tpu_custom_call.1} parent=1 // pred_fallthru
      _
    // Predicated region
    $region30: #{tpu_custom_call.1} parent=1 // pred_check
      _
    $region31: #{tpu_custom_call.1} parent=1 // pred_check_branch
      %399 = sbr.rel (0) target = $region33
    $region32: #{tpu_custom_call.1} parent=1 // pred_region
      %401 = vsyncadd [#allocation9], 0
      %s403 = sshll.u32 [#allocation10], 4
      %s404 = int_to_ptr.vmem [resolvable:$true] %s403
      %s405 = sshll.u32 %s5, 4
      %s406 = int_to_ptr.hbm [resolvable:$true] %s405
      %408 = dma.vmem_to_hbm [thread:$0]  %s404, 32, %s406, [#allocation9]
    $region33: #{tpu_custom_call.1} parent=1 // pred_fallthru
      _
    // Predicated region
    $region34: #{tpu_custom_call.1} parent=1 // pred_check
      _
    $region35: #{tpu_custom_call.1} parent=1 // pred_check_branch
      %410 = sbr.rel (0) target = $region37
    $region36: #{tpu_custom_call.1} parent=1 // pred_region
      %412 = vsyncadd [#allocation12], 0
      %s414 = sshll.u32 [#allocation11], 4
      %s415 = int_to_ptr.vmem [resolvable:$true] %s414
      %s416 = sshll.u32 %s6, 4
      %s417 = int_to_ptr.hbm [resolvable:$true] %s416
      %419 = dma.vmem_to_hbm [thread:$0]  %s415, 16, %s417, [#allocation12]
    $region37: #{tpu_custom_call.1} parent=1 // pred_fallthru
      _
    // Predicated region
    $region38: #{tpu_custom_call.1} parent=1 // pred_check
      _
    $region39: #{tpu_custom_call.1} parent=1 // pred_check_branch
      %421 = sbr.rel (0) target = $region41
    $region40: #{tpu_custom_call.1} parent=1 // pred_region
      %423 = dma.done [#allocation4], 1024
    $region41: #{tpu_custom_call.1} parent=1 // pred_fallthru
      _
    // Predicated region
    $region42: #{tpu_custom_call.1} parent=1 // pred_check
      _
    $region43: #{tpu_custom_call.1} parent=1 // pred_check_branch
      %425 = sbr.rel (0) target = $region45
    $region44: #{tpu_custom_call.1} parent=1 // pred_region
      %427 = dma.done [#allocation9], 128
    $region45: #{tpu_custom_call.1} parent=1 // pred_fallthru
      _
    // Predicated region
    $region46: #{tpu_custom_call.1} parent=1 // pred_check
      _
    $region47: #{tpu_custom_call.1} parent=1 // pred_check_branch
      %429 = sbr.rel (0) target = $region49
    $region48: #{tpu_custom_call.1} parent=1 // pred_region
      %431 = dma.done [#allocation9], 32
    $region49: #{tpu_custom_call.1} parent=1 // pred_fallthru
      _
    // Predicated region
    $region50: #{tpu_custom_call.1} parent=1 // pred_check
      _
    $region51: #{tpu_custom_call.1} parent=1 // pred_check_branch
      %433 = sbr.rel (0) target = $region53
    $region52: #{tpu_custom_call.1} parent=1 // pred_region
      %435 = dma.done [#allocation12], 16
    $region53: #{tpu_custom_call.1} parent=1 // pred_fallthru
      _
    %436 = vsyncpa [#allocation3], 1
    %437 = vsyncpa [#allocation6], 1
    %438 = vsyncpa [#allocation4], 1
    %439 = vsyncpa [#allocation9], 1
    %440 = vsyncpa [#allocation12], 1

</llo_original>
